<compile_context>
chip_gen: v6e
topology: v6e:2x2x1
jax: 0.10.0
libtpu: 0.0.40
codegen_flags: <defaults>
</compile_context>

<pallas_src>
import jax
import jax.numpy as jnp
from jax.experimental import pallas as pl
from jax.experimental.pallas import tpu as pltpu

EPS = 1e-5
LANE = 128
SUBLANE = 8


def _round_up(x, m):
    return ((x + m - 1) // m) * m


# --------------------------- Pallas kernel bodies --------------------------- #
def _gemm_stats_kernel(p_ref, w_ref, acc_ref, sum_ref, ssq_ref):
    """acc = patches @ W (bf16 -> f32 on MXU); per-tile channel sum / sumsq."""
    acc = jnp.dot(p_ref[...], w_ref[...], preferred_element_type=jnp.float32)
    acc_ref[...] = acc
    c = acc.shape[1]
    s = jnp.sum(acc, axis=0, keepdims=True)          # (1, C)
    q = jnp.sum(acc * acc, axis=0, keepdims=True)    # (1, C)
    sum_ref[...] = jnp.broadcast_to(s, (SUBLANE, c))[None]
    ssq_ref[...] = jnp.broadcast_to(q, (SUBLANE, c))[None]


def _bn_relu_kernel(acc_ref, scale_ref, shift_ref, o_ref):
    """o = relu(acc * scale + shift)   (BatchNorm affine folded to scale/shift)."""
    o_ref[...] = jnp.maximum(acc_ref[...] * scale_ref[...] + shift_ref[...], 0.0)


def _bn_add_relu_kernel(acc_ref, scale_ref, shift_ref,
                        sc_acc_ref, sc_scale_ref, sc_shift_ref, o_ref):
    """o = relu(bn(acc) + bn(shortcut))  with folded affines for both branches."""
    main = acc_ref[...] * scale_ref[...] + shift_ref[...]
    short = sc_acc_ref[...] * sc_scale_ref[...] + sc_shift_ref[...]
    o_ref[...] = jnp.maximum(main + short, 0.0)


# ------------------------------ Pallas glue -------------------------------- #
def _mosaic_params(est_bytes):
    limit = int(min(64 * 1024 * 1024, max(32 * 1024 * 1024, 2 * int(est_bytes))))
    return pltpu.CompilerParams(dimension_semantics=("parallel",),
                                vmem_limit_bytes=limit)


def _gemm_with_stats(patches_bf16, w_bf16, tm):
    """Tiled GEMM over M; returns (acc f32 [M_pad, C_pad], sum [C_pad], sumsq [C_pad])."""
    m_pad, k_pad = patches_bf16.shape
    c_pad = w_bf16.shape[1]
    ntiles = m_pad // tm
    est = (2 * tm * k_pad * 2          # double-buffered bf16 patch tiles
           + 2 * k_pad * c_pad * 2     # resident bf16 weights (conservative x2)
           + 2 * tm * c_pad * 4        # f32 acc output tiles
           + 4 * SUBLANE * c_pad * 4)  # stats tiles
    acc, s, q = pl.pallas_call(
        _gemm_stats_kernel,
        out_shape=(
            jax.ShapeDtypeStruct((m_pad, c_pad), jnp.float32),
            jax.ShapeDtypeStruct((ntiles, SUBLANE, c_pad), jnp.float32),
            jax.ShapeDtypeStruct((ntiles, SUBLANE, c_pad), jnp.float32),
        ),
        grid=(ntiles,),
        in_specs=[
            pl.BlockSpec((tm, k_pad), lambda i: (i, 0)),
            pl.BlockSpec((k_pad, c_pad), lambda i: (0, 0)),   # weights stay resident
        ],
        out_specs=(
            pl.BlockSpec((tm, c_pad), lambda i: (i, 0)),
            pl.BlockSpec((1, SUBLANE, c_pad), lambda i: (i, 0, 0)),
            pl.BlockSpec((1, SUBLANE, c_pad), lambda i: (i, 0, 0)),
        ),
        compiler_params=_mosaic_params(est),
    )(patches_bf16, w_bf16)
    return acc, jnp.sum(s[:, 0, :], axis=0), jnp.sum(q[:, 0, :], axis=0)


def _bn_relu(acc, scale, shift, tm):
    m_pad, c_pad = acc.shape
    ntiles = m_pad // tm
    est = 4 * tm * c_pad * 4 + 4 * c_pad * 4
    return pl.pallas_call(
        _bn_relu_kernel,
        out_shape=jax.ShapeDtypeStruct((m_pad, c_pad), jnp.float32),
        grid=(ntiles,),
        in_specs=[pl.BlockSpec((tm, c_pad), lambda i: (i, 0)),
                  pl.BlockSpec((1, c_pad), lambda i: (0, 0)),
                  pl.BlockSpec((1, c_pad), lambda i: (0, 0))],
        out_specs=pl.BlockSpec((tm, c_pad), lambda i: (i, 0)),
        compiler_params=_mosaic_params(est),
    )(acc, scale, shift)


def _bn_add_relu(acc, scale, shift, sc_acc, sc_scale, sc_shift, tm):
    m_pad, c_pad = acc.shape
    ntiles = m_pad // tm
    est = 6 * tm * c_pad * 4 + 8 * c_pad * 4
    return pl.pallas_call(
        _bn_add_relu_kernel,
        out_shape=jax.ShapeDtypeStruct((m_pad, c_pad), jnp.float32),
        grid=(ntiles,),
        in_specs=[pl.BlockSpec((tm, c_pad), lambda i: (i, 0)),
                  pl.BlockSpec((1, c_pad), lambda i: (0, 0)),
                  pl.BlockSpec((1, c_pad), lambda i: (0, 0)),
                  pl.BlockSpec((tm, c_pad), lambda i: (i, 0)),
                  pl.BlockSpec((1, c_pad), lambda i: (0, 0)),
                  pl.BlockSpec((1, c_pad), lambda i: (0, 0))],
        out_specs=pl.BlockSpec((tm, c_pad), lambda i: (i, 0)),
        compiler_params=_mosaic_params(est),
    )(acc, scale, shift, sc_acc, sc_scale, sc_shift)


# ------------------------------- JAX glue ---------------------------------- #
def _im2col(x, kh=3, kw=3, stride=1, pad=1):
    """x: NHWC -> patches [N*Ho*Wo, kh*kw*C] with K ordered (kh, kw, c)."""
    n, h, w, c = x.shape
    xp = jnp.pad(x, ((0, 0), (pad, pad), (pad, pad), (0, 0)))
    ho = (h + 2 * pad - kh) // stride + 1
    wo = (w + 2 * pad - kw) // stride + 1
    cols = []
    for i in range(kh):
        for j in range(kw):
            cols.append(xp[:, i:i + stride * ho:stride, j:j + stride * wo:stride, :])
    patches = jnp.stack(cols, axis=3)                 # [n, ho, wo, kh*kw, c]
    return patches.reshape(n * ho * wo, kh * kw * c), (n, ho, wo)


def _fold_bn(sum_c, ssq_c, m, gamma_pad, beta_pad):
    """Fold training-mode BN (biased var over M rows) into per-channel scale/shift."""
    mean = sum_c / m
    var = jnp.maximum(ssq_c / m - mean * mean, 0.0)
    scale = gamma_pad * jax.lax.rsqrt(var + EPS)
    shift = beta_pad - mean * scale
    return scale.reshape(1, -1), shift.reshape(1, -1)


def _pad_vec(v, c_pad):
    v = v.reshape(-1).astype(jnp.float32)
    return jnp.pad(v, (0, c_pad - v.shape[0]))


def init_basic_block_params(key, in_channels, out_channels, stride):
    """Deterministic synthetic init; matches PyTorch parameter shapes."""
    k1, k2, k3 = jax.random.split(key, 3)
    p = {
        "w1": 0.1 * jax.random.normal(k1, (out_channels, in_channels, 3, 3), jnp.float32),
        "g1": jnp.ones((1, out_channels), jnp.float32),
        "b1": jnp.zeros((1, out_channels), jnp.float32),
        "w2": 0.1 * jax.random.normal(k2, (out_channels, out_channels, 3, 3), jnp.float32),
        "g2": jnp.ones((1, out_channels), jnp.float32),
        "b2": jnp.zeros((1, out_channels), jnp.float32),
    }
    if stride != 1 or in_channels != out_channels:
        p["ws"] = 0.1 * jax.random.normal(k3, (out_channels, in_channels, 1, 1), jnp.float32)
        p["gs"] = jnp.ones((1, out_channels), jnp.float32)
        p["bs"] = jnp.zeros((1, out_channels), jnp.float32)
    return p


def basic_block_forward(x_nchw, params, stride):
    """Forward pass of the ResNet BasicBlock (training-mode BatchNorm)."""
    x = jnp.transpose(x_nchw, (0, 2, 3, 1)).astype(jnp.float32)  # NHWC
    n, h, w, cin = x.shape
    cout = params["w1"].shape[0]
    c_pad = _round_up(cout, LANE)
    cin_pad = _round_up(cin, LANE)

    # ---- conv1 (3x3, stride, pad=1) + bn1 + relu ---------------------------
    p1, (_, ho, wo) = _im2col(x, stride=stride)
    m = n * ho * wo
    tm = min(512, _round_up(m, SUBLANE))
    m_pad = _round_up(m, tm)
    k1 = p1.shape[1]
    k1_pad = _round_up(k1, LANE)

    p1p = jnp.pad(p1, ((0, m_pad - m), (0, k1_pad - k1))).astype(jnp.bfloat16)
    w1m = jnp.transpose(params["w1"], (2, 3, 1, 0)).reshape(k1, cout)
    w1p = jnp.pad(w1m, ((0, k1_pad - k1), (0, c_pad - cout))).astype(jnp.bfloat16)
    g1 = _pad_vec(params["g1"], c_pad)
    b1 = _pad_vec(params["b1"], c_pad)

    acc1, s1, q1 = _gemm_with_stats(p1p, w1p, tm)
    scale1, shift1 = _fold_bn(s1, q1, float(m), g1, b1)
    out1 = _bn_relu(acc1, scale1, shift1, tm)                    # (m_pad, c_pad) f32
    out1_nhwc = out1[:m, :cout].reshape(n, ho, wo, cout)

    # ---- shortcut: identity or 1x1-conv(stride) + bn ----------------------
    if stride != 1 or cin != cout:
        xs = x[:, ::stride, ::stride, :].reshape(m, cin)
        xsp = jnp.pad(xs, ((0, m_pad - m), (0, cin_pad - cin))).astype(jnp.bfloat16)
        wsm = params["ws"].reshape(cout, cin).T
        wsp = jnp.pad(wsm, ((0, cin_pad - cin), (0, c_pad - cout))).astype(jnp.bfloat16)
        gs = _pad_vec(params["gs"], c_pad)
        bs = _pad_vec(params["bs"], c_pad)
        sc_acc, ss, sq = _gemm_with_stats(xsp, wsp, tm)
        sc_scale, sc_shift = _fold_bn(ss, sq, float(m), gs, bs)
    else:
        sc_acc = jnp.pad(x.reshape(m, cin), ((0, m_pad - m), (0, c_pad - cin)))
        sc_scale = jnp.ones((1, c_pad), jnp.float32)
        sc_shift = jnp.zeros((1, c_pad), jnp.float32)

    # ---- conv2 (3x3, stride=1, pad=1) + bn2 + add shortcut + relu ----------
    p2, _ = _im2col(out1_nhwc, stride=1)
    k2 = p2.shape[1]
    k2_pad = _round_up(k2, LANE)
    p2p = jnp.pad(p2, ((0, m_pad - m), (0, k2_pad - k2))).astype(jnp.bfloat16)
    w2m = jnp.transpose(params["w2"], (2, 3, 1, 0)).reshape(k2, cout)
    w2p = jnp.pad(w2m, ((0, k2_pad - k2), (0, c_pad - cout))).astype(jnp.bfloat16)
    g2 = _pad_vec(params["g2"], c_pad)
    b2 = _pad_vec(params["b2"], c_pad)

    acc2, s2, q2 = _gemm_with_stats(p2p, w2p, tm)
    scale2, shift2 = _fold_bn(s2, q2, float(m), g2, b2)

    out = _bn_add_relu(acc2, scale2, shift2, sc_acc, sc_scale, sc_shift, tm)
    return jnp.transpose(out[:m, :cout].reshape(n, ho, wo, cout), (0, 3, 1, 2))


# ------------------------- pure-JAX reference check ------------------------ #
def _reference(x_nchw, params, stride):
    x = jnp.transpose(x_nchw, (0, 2, 3, 1))

    def conv(inp, w_oihw, s):
        w = jnp.transpose(w_oihw, (2, 3, 1, 0))  # HWIO
        pad = (w.shape[0] - 1) // 2
        return jax.lax.conv_general_dilated(
            inp, w, (s, s), [(pad, pad), (pad, pad)],
            dimension_numbers=("NHWC", "HWIO", "NHWC"))

    def bn(y, g, b):
        mean = jnp.mean(y, axis=(0, 1, 2), keepdims=True)
        var = jnp.mean((y - mean) ** 2, axis=(0, 1, 2), keepdims=True)
        return (y - mean) * jax.lax.rsqrt(var + EPS) * g.reshape(1, 1, 1, -1) + b.reshape(1, 1, 1, -1)

    out = jax.nn.relu(bn(conv(x, params["w1"], stride), params["g1"], params["b1"]))
    out = bn(conv(out, params["w2"], 1), params["g2"], params["b2"])
    if "ws" in params:
        sc = bn(conv(x, params["ws"], stride), params["gs"], params["bs"])
    else:
        sc = x
    return jnp.transpose(jax.nn.relu(out + sc), (0, 3, 1, 2))


# ---------------------------------- main ------------------------------------ #
if __name__ == "__main__":
    key = jax.random.PRNGKey(0)
    kx, kp, kx2, kp2 = jax.random.split(key, 4)

    # Case 1: projection shortcut (stride 2, channel expansion).
    N, C_IN, C_OUT, H, W, STRIDE = 2, 4, 8, 16, 16, 2
    x = jax.random.normal(kx, (N, C_IN, H, W), jnp.float32)
    params = init_basic_block_params(kp, C_IN, C_OUT, STRIDE)
    out = jax.block_until_ready(basic_block_forward(x, params, STRIDE))
    ref = jax.block_until_ready(_reference(x, params, STRIDE))
    assert out.shape == (N, C_OUT, H // STRIDE, W // STRIDE)
    assert jnp.allclose(out, ref, atol=5e-2, rtol=5e-2), float(jnp.max(jnp.abs(out - ref)))

    # Case 2: identity shortcut (stride 1, same channels).
    x2 = jax.random.normal(kx2, (2, 8, 8, 8), jnp.float32)
    params2 = init_basic_block_params(kp2, 8, 8, 1)
    out2 = jax.block_until_ready(basic_block_forward(x2, params2, 1))
    ref2 = jax.block_until_ready(_reference(x2, params2, 1))
    assert out2.shape == (2, 8, 8, 8)
    assert jnp.allclose(out2, ref2, atol=5e-2, rtol=5e-2), float(jnp.max(jnp.abs(out2 - ref2)))

    print("KERNEL_OK")
</pallas_src>

<mosaic_0001>
module attributes {stable_mosaic.version = 11 : i64} {
  func.func @_gemm_stats_kernel(%arg0: i32, %arg1: memref<128x128xbf16, #tpu.memory_space<vmem>>, %arg2: memref<128x128xbf16, #tpu.memory_space<vmem>>, %arg3: memref<128x128xf32, #tpu.memory_space<vmem>>, %arg4: memref<1x8x128xf32, #tpu.memory_space<vmem>>, %arg5: memref<1x8x128xf32, #tpu.memory_space<vmem>>) attributes {dimension_semantics = [#tpu.dimension_semantics<parallel>], iteration_bounds = array<i64: 1>, scalar_prefetch = 0 : i64, scratch_operands = 0 : i64, tpu.core_type = #tpu.core_type<tc>, window_params = [{transform_indices = @transform_0, window_bounds = array<i64: 128, 128>}, {pipeline_mode = #tpu.pipeline_mode<synchronous>, transform_indices = @transform_1, window_bounds = array<i64: 128, 128>}, {transform_indices = @transform_2, window_bounds = array<i64: 128, 128>}, {transform_indices = @transform_3, window_bounds = array<i64: 1, 8, 128>}, {transform_indices = @transform_4, window_bounds = array<i64: 1, 8, 128>}]} {
    %c0 = arith.constant 0 : index
    %c0_0 = arith.constant 0 : index
    %0 = vector.load %arg1[%c0, %c0_0] : memref<128x128xbf16, #tpu.memory_space<vmem>>, vector<128x128xbf16>
    %c0_1 = arith.constant 0 : index
    %c0_2 = arith.constant 0 : index
    %1 = vector.load %arg2[%c0_1, %c0_2] : memref<128x128xbf16, #tpu.memory_space<vmem>>, vector<128x128xbf16>
    %cst = arith.constant dense<0.000000e+00> : vector<128x128xf32>
    %2 = tpu.matmul %0, %1, %cst {dimension_numbers = #tpu.dot_dimension_numbers<[1], [0], [0], [1], [0, 0, 1, 1], [], []>} : vector<128x128xbf16>, vector<128x128xbf16>, vector<128x128xf32> -> vector<128x128xf32>
    %c0_3 = arith.constant 0 : index
    %c0_4 = arith.constant 0 : index
    %3 = vector.load %arg3[%c0_3, %c0_4] : memref<128x128xf32, #tpu.memory_space<vmem>>, vector<128x128xf32>
    tpu.vector_store %arg3[%c0_3, %c0_4], %2 {strides = array<i32>} : memref<128x128xf32, #tpu.memory_space<vmem>>, vector<128x128xf32>,
    %cst_5 = arith.constant dense<0.000000e+00> : vector<128xf32>
    %4 = vector.multi_reduction <add>, %2, %cst_5 [0] : vector<128x128xf32> to vector<128xf32>
    %5 = vector.shape_cast %4 : vector<128xf32> to vector<1x128xf32>
    %6 = arith.mulf %2, %2 : vector<128x128xf32>
    %cst_6 = arith.constant dense<0.000000e+00> : vector<128xf32>
    %7 = vector.multi_reduction <add>, %6, %cst_6 [0] : vector<128x128xf32> to vector<128xf32>
    %8 = vector.shape_cast %7 : vector<128xf32> to vector<1x128xf32>
    %9 = vector.shape_cast %5 : vector<1x128xf32> to vector<1x128xf32>
    %10 = vector.broadcast %9 : vector<1x128xf32> to vector<8x128xf32>
    %11 = vector.shape_cast %10 : vector<8x128xf32> to vector<1x8x128xf32>
    %c0_7 = arith.constant 0 : index
    %c0_8 = arith.constant 0 : index
    %c0_9 = arith.constant 0 : index
    %12 = vector.load %arg4[%c0_7, %c0_8, %c0_9] : memref<1x8x128xf32, #tpu.memory_space<vmem>>, vector<1x8x128xf32>
    tpu.vector_store %arg4[%c0_7, %c0_8, %c0_9], %11 {strides = array<i32>} : memref<1x8x128xf32, #tpu.memory_space<vmem>>, vector<1x8x128xf32>,
    %13 = vector.shape_cast %8 : vector<1x128xf32> to vector<1x128xf32>
    %14 = vector.broadcast %13 : vector<1x128xf32> to vector<8x128xf32>
    %15 = vector.shape_cast %14 : vector<8x128xf32> to vector<1x8x128xf32>
    %c0_10 = arith.constant 0 : index
    %c0_11 = arith.constant 0 : index
    %c0_12 = arith.constant 0 : index
    %16 = vector.load %arg5[%c0_10, %c0_11, %c0_12] : memref<1x8x128xf32, #tpu.memory_space<vmem>>, vector<1x8x128xf32>
    tpu.vector_store %arg5[%c0_10, %c0_11, %c0_12], %15 {strides = array<i32>} : memref<1x8x128xf32, #tpu.memory_space<vmem>>, vector<1x8x128xf32>,
    return
  }
  func.func @transform_0(%arg0: i32) -> (i32, i32) {
    %c0_i32 = arith.constant 0 : i32
    %c0_i32_0 = arith.constant 0 : i32
    return %arg0, %c0_i32 : i32, i32
  }
  func.func @transform_1(%arg0: i32) -> (i32, i32) {
    %c0_i32 = arith.constant 0 : i32
    %c0_i32_0 = arith.constant 0 : i32
    %c0_i32_1 = arith.constant 0 : i32
    return %c0_i32, %c0_i32_0 : i32, i32
  }
  func.func @transform_2(%arg0: i32) -> (i32, i32) {
    %c0_i32 = arith.constant 0 : i32
    %c0_i32_0 = arith.constant 0 : i32
    return %arg0, %c0_i32 : i32, i32
  }
  func.func @transform_3(%arg0: i32) -> (i32, i32, i32) {
    %c0_i32 = arith.constant 0 : i32
    %c0_i32_0 = arith.constant 0 : i32
    %c0_i32_1 = arith.constant 0 : i32
    return %arg0, %c0_i32, %c0_i32_0 : i32, i32, i32
  }
  func.func @transform_4(%arg0: i32) -> (i32, i32, i32) {
    %c0_i32 = arith.constant 0 : i32
    %c0_i32_0 = arith.constant 0 : i32
    %c0_i32_1 = arith.constant 0 : i32
    return %arg0, %c0_i32, %c0_i32_0 : i32, i32, i32
  }
}

</mosaic_0001>

<llo_original>
// kernel: tpu_custom_call.1
$region0: #{tpu_custom_call.1}
  #allocation0 [shape = 'u32[]', space=smem, size = 0x4, offset = 0x4, fixed_abs, tag = 'smem constant byte address 0x4 - core index']
  #allocation1 [shape = 'u32[144,128]{1,0:T(1,128)}', space=vmem, size = 0x12000, scoped, tag = 'internal scratch']
  %s0 = inlined_call_operand.hbm [shape: bf16[128,128], index: 0, kind: input, shape index: {}]
  %s1 = inlined_call_operand.hbm [shape: bf16[128,128], index: 1, kind: input, shape index: {}]
  %s2 = inlined_call_operand.hbm [shape: f32[128,128], index: 2, kind: output, shape index: {0}]
  %s3 = inlined_call_operand.hbm [shape: f32[1,8,128], index: 3, kind: output, shape index: {1}]
  %s4 = inlined_call_operand.hbm [shape: f32[1,8,128], index: 4, kind: output, shape index: {2}]
  %5 = xla_tuple %s2, %s3, %s4
  %s6 = sld [smem:[#allocation0]]
  $region42: #{tpu_custom_call.1} parent=0
    _
  %s8 = ssub.s32 1, %s6
  %s9 = scalar_select 0, %s8, %s6
  $region1: #{tpu_custom_call.1} parent=0
    #allocation2 [shape = 'u8[32768]{0}', space=vmem, size = 0x8000, scoped, tag = 'input window, operand 0, single buffered']
    #allocation3 [shape = 's32[1]{0}', space=sflag, size = 0x4, scoped, tag = 'scoped memory for tpu_custom_call.1']
    #allocation4 [shape = 's32[1]{0}', space=sflag, size = 0x4, scoped, tag = 'scoped memory for tpu_custom_call.1']
    #allocation5 [shape = 'u8[32768]{0}', space=vmem, size = 0x8000, scoped, tag = 'input window, operand 1, single buffered']
    #allocation6 [shape = 's32[1]{0}', space=sflag, size = 0x4, scoped, tag = 'scoped memory for tpu_custom_call.1']
    #allocation7 [shape = 'u8[65536]{0}', space=vmem, size = 0x10000, scoped, tag = 'output window, operand 0, single buffered']
    #allocation8 [shape = 'u8[4096]{0}', space=vmem, size = 0x1000, scoped, tag = 'output window, operand 1, single buffered']
    #allocation9 [shape = 's32[1]{0}', space=sflag, size = 0x4, scoped, tag = 'scoped memory for tpu_custom_call.1']
    #allocation10 [shape = 'u8[4096]{0}', space=vmem, size = 0x1000, scoped, tag = 'output window, operand 2, single buffered']
    %10 = vsyncpa [#allocation3], 0
    %11 = vsyncpa [#allocation6], 0
    %12 = vsyncpa [#allocation4], 0
    %13 = vsyncpa [#allocation9], 0
    // Predicated region
    $region2: #{tpu_custom_call.1} parent=1 // pred_check
      _
    $region3: #{tpu_custom_call.1} parent=1 // pred_check_branch
      %15 = sbr.rel (0) target = $region5
    $region4: #{tpu_custom_call.1} parent=1 // pred_region
      %s17 = ssub.s32 1024, 1024
      %18 = vsyncadd [#allocation3], %s17
      %s19 = sshll.u32 [#allocation2], 4
      %s20 = int_to_ptr.vmem [resolvable:$true] %s19
      %25 = dma.hbm_to_vmem [thread:$0]  %s0, 1024, %s20, [#allocation3], 64, 64, 4
    $region5: #{tpu_custom_call.1} parent=1 // pred_fallthru
      _
    // Predicated region
    $region6: #{tpu_custom_call.1} parent=1 // pred_check
      _
    $region7: #{tpu_custom_call.1} parent=1 // pred_check_branch
      %27 = sbr.rel (0) target = $region9
    $region8: #{tpu_custom_call.1} parent=1 // pred_region
      %s29 = ssub.s32 1024, 1024
      %30 = vsyncadd [#allocation6], %s29
      %s31 = sshll.u32 [#allocation5], 4
      %s32 = int_to_ptr.vmem [resolvable:$true] %s31
      %37 = dma.hbm_to_vmem [thread:$0]  %s1, 1024, %s32, [#allocation6], 64, 64, 4
    $region9: #{tpu_custom_call.1} parent=1 // pred_fallthru
      _
    // Predicated region
    $region10: #{tpu_custom_call.1} parent=1 // pred_check
      _
    $region11: #{tpu_custom_call.1} parent=1 // pred_check_branch
      %39 = sbr.rel (0) target = $region13
    $region12: #{tpu_custom_call.1} parent=1 // pred_region
      %40 = dma.done [#allocation3], 1024
    $region13: #{tpu_custom_call.1} parent=1 // pred_fallthru
      _
    // Predicated region
    $region14: #{tpu_custom_call.1} parent=1 // pred_check
      _
    $region15: #{tpu_custom_call.1} parent=1 // pred_check_branch
      %42 = sbr.rel (0) target = $region17
    $region16: #{tpu_custom_call.1} parent=1 // pred_region
      %43 = dma.done [#allocation6], 1024
    $region17: #{tpu_custom_call.1} parent=1 // pred_fallthru
      _
    %v45 = vld [vmem:[#allocation2] sm:$0xf]
    %v46 = vld [vmem:[#allocation2 + $0x4] sm:$0xf]
    %v47 = vld [vmem:[#allocation2 + $0x8] sm:$0xf]
    %v48 = vld [vmem:[#allocation2 + $0xc] sm:$0xf]
    %v49 = vld [vmem:[#allocation2 + $0x10] sm:$0xf]
    %v50 = vld [vmem:[#allocation2 + $0x14] sm:$0xf]
    %v51 = vld [vmem:[#allocation2 + $0x18] sm:$0xf]
    %v52 = vld [vmem:[#allocation2 + $0x1c] sm:$0xf]
    %v53 = vld [vmem:[#allocation2 + $0x20] sm:$0xf]
    %v54 = vld [vmem:[#allocation2 + $0x24] sm:$0xf]
    %v55 = vld [vmem:[#allocation2 + $0x28] sm:$0xf]
    %v56 = vld [vmem:[#allocation2 + $0x2c] sm:$0xf]
    %v57 = vld [vmem:[#allocation2 + $0x30] sm:$0xf]
    %v58 = vld [vmem:[#allocation2 + $0x34] sm:$0xf]
    %v59 = vld [vmem:[#allocation2 + $0x38] sm:$0xf]
    %v60 = vld [vmem:[#allocation2 + $0x3c] sm:$0xf]
    %v61 = vld [vmem:[#allocation5] sm:$0xf]
    %v62 = vld [vmem:[#allocation5 + $0x4] sm:$0xf]
    %v63 = vld [vmem:[#allocation5 + $0x8] sm:$0xf]
    %v64 = vld [vmem:[#allocation5 + $0xc] sm:$0xf]
    %v65 = vld [vmem:[#allocation5 + $0x10] sm:$0xf]
    %v66 = vld [vmem:[#allocation5 + $0x14] sm:$0xf]
    %v67 = vld [vmem:[#allocation5 + $0x18] sm:$0xf]
    %v68 = vld [vmem:[#allocation5 + $0x1c] sm:$0xf]
    %v69 = vld [vmem:[#allocation5 + $0x20] sm:$0xf]
    %v70 = vld [vmem:[#allocation5 + $0x24] sm:$0xf]
    %v71 = vld [vmem:[#allocation5 + $0x28] sm:$0xf]
    %v72 = vld [vmem:[#allocation5 + $0x2c] sm:$0xf]
    %v73 = vld [vmem:[#allocation5 + $0x30] sm:$0xf]
    %v74 = vld [vmem:[#allocation5 + $0x34] sm:$0xf]
    %v75 = vld [vmem:[#allocation5 + $0x38] sm:$0xf]
    %v76 = vld [vmem:[#allocation5 + $0x3c] sm:$0xf]
    %v93 = vunpack.c.l.b16 %v45
    %v94 = vunpack.c.l.b16 %v46
    %v95 = vunpack.c.l.b16 %v47
    %v96 = vunpack.c.l.b16 %v48
    %v97 = vunpack.c.l.b16 %v49
    %v98 = vunpack.c.l.b16 %v50
    %v99 = vunpack.c.l.b16 %v51
    %v100 = vunpack.c.l.b16 %v52
    %v101 = vunpack.c.l.b16 %v53
    %v102 = vunpack.c.l.b16 %v54
    %v103 = vunpack.c.l.b16 %v55
    %v104 = vunpack.c.l.b16 %v56
    %v105 = vunpack.c.l.b16 %v57
    %v106 = vunpack.c.l.b16 %v58
    %v107 = vunpack.c.l.b16 %v59
    %v108 = vunpack.c.l.b16 %v60
    %v109 = vpack.c.b16 %v94, %v93
    %v110 = vpack.c.b16 %v96, %v95
    %v111 = vpack.c.b16 %v98, %v97
    %v112 = vpack.c.b16 %v100, %v99
    %v113 = vpack.c.b16 %v102, %v101
    %v114 = vpack.c.b16 %v104, %v103
    %v115 = vpack.c.b16 %v106, %v105
    %v116 = vpack.c.b16 %v108, %v107
    %v141 = vunpack.c.l.b16 %v61
    %v142 = vunpack.c.l.b16 %v62
    %v143 = vunpack.c.l.b16 %v63
    %v144 = vunpack.c.l.b16 %v64
    %v145 = vunpack.c.l.b16 %v65
    %v146 = vunpack.c.l.b16 %v66
    %v147 = vunpack.c.l.b16 %v67
    %v148 = vunpack.c.l.b16 %v68
    %v149 = vunpack.c.l.b16 %v69
    %v150 = vunpack.c.l.b16 %v70
    %v151 = vunpack.c.l.b16 %v71
    %v152 = vunpack.c.l.b16 %v72
    %v153 = vunpack.c.l.b16 %v73
    %v154 = vunpack.c.l.b16 %v74
    %v155 = vunpack.c.l.b16 %v75
    %v156 = vunpack.c.l.b16 %v76
    %v157 = vpack.c.b16 %v142, %v141
    %v158 = vpack.c.b16 %v144, %v143
    %v159 = vpack.c.b16 %v146, %v145
    %v160 = vpack.c.b16 %v148, %v147
    %v161 = vpack.c.b16 %v150, %v149
    %v162 = vpack.c.b16 %v152, %v151
    %v163 = vpack.c.b16 %v154, %v153
    %v164 = vpack.c.b16 %v156, %v155
    %173 = vmatprep.subr.bf16.mxu0 0
    %174 = vmatpush1.bf16.msra.mxu0 %v164
    %175 = vmatprep.subr.bf16.mxu0 0
    %176 = vmatpush1.bf16.msra.mxu0 %v163
    %177 = vmatprep.subr.bf16.mxu0 0
    %178 = vmatpush1.bf16.msra.mxu0 %v162
    %179 = vmatprep.subr.bf16.mxu0 0
    %180 = vmatpush1.bf16.msra.mxu0 %v161
    %181 = vmatprep.subr.bf16.mxu0 0
    %182 = vmatpush1.bf16.msra.mxu0 %v160
    %183 = vmatprep.subr.bf16.mxu0 0
    %184 = vmatpush1.bf16.msra.mxu0 %v159
    %185 = vmatprep.subr.bf16.mxu0 0
    %186 = vmatpush1.bf16.msra.mxu0 %v158
    %187 = vmatprep.subr.bf16.mxu0 0
    %188 = vmatpush1.bf16.msra.mxu0 %v157
    %189 = vmatprep.subr.bf16.mxu0 0
    %190 = vmatpush2.bf16.msra.mxu0 0
    %191 = vmatprep.subr.bf16.mxu0 0
    %192 = vmatpush2.bf16.msra.mxu0 0
    %193 = vmatprep.subr.bf16.mxu0 0
    %194 = vmatpush2.bf16.msra.mxu0 0
    %195 = vmatprep.subr.bf16.mxu0 0
    %196 = vmatpush2.bf16.msra.mxu0 0
    %197 = vmatprep.subr.bf16.mxu0 0
    %198 = vmatpush2.bf16.msra.mxu0 0
    %199 = vmatprep.subr.bf16.mxu0 0
    %200 = vmatpush2.bf16.msra.mxu0 0
    %201 = vmatprep.subr.bf16.mxu0 0
    %202 = vmatpush2.bf16.msra.mxu0 0
    %203 = vmatprep.subr.bf16.mxu0 0
    %204 = vmatpush2.bf16.msra.mxu0 0
    %205 = vmatprep.mubr.bf16.mxu0 0
    %206 = vmatmul.mubr.bf16.gmra.mxu0 %v109
    %v207 = vpop.f32.mrf.mxu0
    %v208 = vadd.f32 0.0, %v207
    %v209 = vpop.f32.mrf.mxu0
    %v210 = vpop.f32.mrf.mxu0
    %v211 = vadd.f32 0.0, %v210
    %v212 = vpop.f32.mrf.mxu0
    %213 = vmatprep.mubr.bf16.mxu0 0
    %214 = vmatmul.mubr.bf16.gmra.mxu0 %v110
    %v215 = vpop.f32.mrf.mxu0
    %v216 = vadd.f32 0.0, %v215
    %v217 = vpop.f32.mrf.mxu0
    %v218 = vpop.f32.mrf.mxu0
    %v219 = vadd.f32 0.0, %v218
    %v220 = vpop.f32.mrf.mxu0
    %221 = vmatprep.mubr.bf16.mxu0 0
    %222 = vmatmul.mubr.bf16.gmra.mxu0 %v111
    %v223 = vpop.f32.mrf.mxu0
    %v224 = vadd.f32 0.0, %v223
    %v225 = vpop.f32.mrf.mxu0
    %v226 = vpop.f32.mrf.mxu0
    %v227 = vadd.f32 0.0, %v226
    %v228 = vpop.f32.mrf.mxu0
    %229 = vmatprep.mubr.bf16.mxu0 0
    %230 = vmatmul.mubr.bf16.gmra.mxu0 %v112
    %v231 = vpop.f32.mrf.mxu0
    %v232 = vadd.f32 0.0, %v231
    %v233 = vpop.f32.mrf.mxu0
    %v234 = vpop.f32.mrf.mxu0
    %v235 = vadd.f32 0.0, %v234
    %v236 = vpop.f32.mrf.mxu0
    %237 = vmatprep.mubr.bf16.mxu0 0
    %238 = vmatmul.mubr.bf16.gmra.mxu0 %v113
    %v239 = vpop.f32.mrf.mxu0
    %v240 = vadd.f32 0.0, %v239
    %v241 = vpop.f32.mrf.mxu0
    %v242 = vpop.f32.mrf.mxu0
    %v243 = vadd.f32 0.0, %v242
    %v244 = vpop.f32.mrf.mxu0
    %245 = vmatprep.mubr.bf16.mxu0 0
    %246 = vmatmul.mubr.bf16.gmra.mxu0 %v114
    %v247 = vpop.f32.mrf.mxu0
    %v248 = vadd.f32 0.0, %v247
    %v249 = vpop.f32.mrf.mxu0
    %v250 = vpop.f32.mrf.mxu0
    %v251 = vadd.f32 0.0, %v250
    %v252 = vpop.f32.mrf.mxu0
    %253 = vmatprep.mubr.bf16.mxu0 0
    %254 = vmatmul.mubr.bf16.gmra.mxu0 %v115
    %v255 = vpop.f32.mrf.mxu0
    %v256 = vadd.f32 0.0, %v255
    %v257 = vpop.f32.mrf.mxu0
    %v258 = vpop.f32.mrf.mxu0
    %v259 = vadd.f32 0.0, %v258
    %v260 = vpop.f32.mrf.mxu0
    %261 = vmatprep.mubr.bf16.mxu0 0
    %262 = vmatmul.mubr.bf16.gmra.mxu0 %v116
    %v263 = vpop.f32.mrf.mxu0
    %v264 = vadd.f32 0.0, %v263
    %v265 = vpop.f32.mrf.mxu0
    %v266 = vpop.f32.mrf.mxu0
    %v267 = vadd.f32 0.0, %v266
    %v268 = vpop.f32.mrf.mxu0
    %269 = vdwg.mxu0
    %270 = vst [vmem:[#allocation7] sm:$0xff] %v208
    %271 = vst [vmem:[#allocation7 + $0x8] sm:$0xff] %v211
    %272 = vst [vmem:[#allocation7 + $0x10] sm:$0xff] %v216
    %273 = vst [vmem:[#allocation7 + $0x18] sm:$0xff] %v219
    %274 = vst [vmem:[#allocation7 + $0x20] sm:$0xff] %v224
    %275 = vst [vmem:[#allocation7 + $0x28] sm:$0xff] %v227
    %276 = vst [vmem:[#allocation7 + $0x30] sm:$0xff] %v232
    %277 = vst [vmem:[#allocation7 + $0x38] sm:$0xff] %v235
    %278 = vst [vmem:[#allocation7 + $0x40] sm:$0xff] %v240
    %279 = vst [vmem:[#allocation7 + $0x48] sm:$0xff] %v243
    %280 = vst [vmem:[#allocation7 + $0x50] sm:$0xff] %v248
    %281 = vst [vmem:[#allocation7 + $0x58] sm:$0xff] %v251
    %282 = vst [vmem:[#allocation7 + $0x60] sm:$0xff] %v256
    %283 = vst [vmem:[#allocation7 + $0x68] sm:$0xff] %v259
    %284 = vst [vmem:[#allocation7 + $0x70] sm:$0xff] %v264
    %285 = vst [vmem:[#allocation7 + $0x78] sm:$0xff] %v267
    %v286 = vadd.f32 %v208, %v211
    %v287 = vadd.f32 %v286, %v216
    %v288 = vadd.f32 %v287, %v219
    %v289 = vadd.f32 %v288, %v224
    %v290 = vadd.f32 %v289, %v227
    %v291 = vadd.f32 %v290, %v232
    %v292 = vadd.f32 %v291, %v235
    %v293 = vadd.f32 %v292, %v240
    %v294 = vadd.f32 %v293, %v243
    %v295 = vadd.f32 %v294, %v248
    %v296 = vadd.f32 %v295, %v251
    %v297 = vadd.f32 %v296, %v256
    %v298 = vadd.f32 %v297, %v259
    %v299 = vadd.f32 %v298, %v264
    %v300 = vadd.f32 %v299, %v267
    %v301 = vrot.slane %v300, 4
    %v302 = vadd.f32 %v300, %v301
    %v303 = vrot.slane %v302, 2
    %v304 = vadd.f32 %v302, %v303
    %v305 = vrot.slane %v304, 1
    %v306 = vadd.f32 %v304, %v305
    %v307 = vmul.f32 %v208, %v208
    %v308 = vmul.f32 %v211, %v211
    %v309 = vmul.f32 %v216, %v216
    %v310 = vmul.f32 %v219, %v219
    %v311 = vmul.f32 %v224, %v224
    %v312 = vmul.f32 %v227, %v227
    %v313 = vmul.f32 %v232, %v232
    %v314 = vmul.f32 %v235, %v235
    %v315 = vmul.f32 %v240, %v240
    %v316 = vmul.f32 %v243, %v243
    %v317 = vmul.f32 %v248, %v248
    %v318 = vmul.f32 %v251, %v251
    %v319 = vmul.f32 %v256, %v256
    %v320 = vmul.f32 %v259, %v259
    %v321 = vmul.f32 %v264, %v264
    %v322 = vmul.f32 %v267, %v267
    %v323 = vadd.f32 %v307, %v308
    %v324 = vadd.f32 %v323, %v309
    %v325 = vadd.f32 %v324, %v310
    %v326 = vadd.f32 %v325, %v311
    %v327 = vadd.f32 %v326, %v312
    %v328 = vadd.f32 %v327, %v313
    %v329 = vadd.f32 %v328, %v314
    %v330 = vadd.f32 %v329, %v315
    %v331 = vadd.f32 %v330, %v316
    %v332 = vadd.f32 %v331, %v317
    %v333 = vadd.f32 %v332, %v318
    %v334 = vadd.f32 %v333, %v319
    %v335 = vadd.f32 %v334, %v320
    %v336 = vadd.f32 %v335, %v321
    %v337 = vadd.f32 %v336, %v322
    %v338 = vrot.slane %v337, 4
    %v339 = vadd.f32 %v337, %v338
    %v340 = vrot.slane %v339, 2
    %v341 = vadd.f32 %v339, %v340
    %v342 = vrot.slane %v341, 1
    %v343 = vadd.f32 %v341, %v342
    %344 = vst [vmem:[#allocation8] sm:$0xff] %v306
    %345 = vst [vmem:[#allocation10] sm:$0xff] %v343
    // Predicated region
    $region18: #{tpu_custom_call.1} parent=1 // pred_check
      _
    $region19: #{tpu_custom_call.1} parent=1 // pred_check_branch
      %347 = sbr.rel (0) target = $region21
    $region20: #{tpu_custom_call.1} parent=1 // pred_region
      %s349 = ssub.s32 2048, 2048
      %350 = vsyncadd [#allocation4], %s349
      %s351 = sshll.u32 [#allocation7], 4
      %s352 = int_to_ptr.vmem [resolvable:$true] %s351
      %357 = dma.vmem_to_hbm [thread:$0]  %s352, 2048, %s2, [#allocation4], 128, 128, 8
    $region21: #{tpu_custom_call.1} parent=1 // pred_fallthru
      _
    // Predicated region
    $region22: #{tpu_custom_call.1} parent=1 // pred_check
      _
    $region23: #{tpu_custom_call.1} parent=1 // pred_check_branch
      %359 = sbr.rel (0) target = $region25
    $region24: #{tpu_custom_call.1} parent=1 // pred_region
      %s361 = ssub.s32 128, 128
      %362 = vsyncadd [#allocation9], %s361
      %s364 = sshll.u32 [#allocation8], 4
      %s365 = int_to_ptr.vmem [resolvable:$true] %s364
      %367 = dma.vmem_to_hbm [thread:$0]  %s365, 128, %s3, [#allocation9]
    $region25: #{tpu_custom_call.1} parent=1 // pred_fallthru
      _
    // Predicated region
    $region26: #{tpu_custom_call.1} parent=1 // pred_check
      _
    $region27: #{tpu_custom_call.1} parent=1 // pred_check_branch
      %369 = sbr.rel (0) target = $region29
    $region28: #{tpu_custom_call.1} parent=1 // pred_region
      %s371 = ssub.s32 128, 128
      %372 = vsyncadd [#allocation9], %s371
      %s374 = sshll.u32 [#allocation10], 4
      %s375 = int_to_ptr.vmem [resolvable:$true] %s374
      %377 = dma.vmem_to_hbm [thread:$0]  %s375, 128, %s4, [#allocation9]
    $region29: #{tpu_custom_call.1} parent=1 // pred_fallthru
      _
    // Predicated region
    $region30: #{tpu_custom_call.1} parent=1 // pred_check
      _
    $region31: #{tpu_custom_call.1} parent=1 // pred_check_branch
      %379 = sbr.rel (0) target = $region33
    $region32: #{tpu_custom_call.1} parent=1 // pred_region
      %380 = dma.done [#allocation4], 2048
    $region33: #{tpu_custom_call.1} parent=1 // pred_fallthru
      _
    // Predicated region
    $region34: #{tpu_custom_call.1} parent=1 // pred_check
      _
    $region35: #{tpu_custom_call.1} parent=1 // pred_check_branch
      %382 = sbr.rel (0) target = $region37
    $region36: #{tpu_custom_call.1} parent=1 // pred_region
      %383 = dma.done [#allocation9], 128
    $region37: #{tpu_custom_call.1} parent=1 // pred_fallthru
      _
    // Predicated region
    $region38: #{tpu_custom_call.1} parent=1 // pred_check
      _
    $region39: #{tpu_custom_call.1} parent=1 // pred_check_branch
      %385 = sbr.rel (0) target = $region41
    $region40: #{tpu_custom_call.1} parent=1 // pred_region
      %386 = dma.done [#allocation9], 128
    $region41: #{tpu_custom_call.1} parent=1 // pred_fallthru
      _
    %387 = vsyncpa [#allocation3], 1
    %388 = vsyncpa [#allocation6], 1
    %389 = vsyncpa [#allocation4], 1
    %390 = vsyncpa [#allocation9], 1

</llo_original>
